<compile_context>
chip_gen: v7x
topology: tpu7x:2x2x1
jax: 0.10.0
libtpu: 0.0.40
codegen_flags: <defaults>
</compile_context>

<pallas_src>
import functools

import jax
import jax.numpy as jnp
from jax.experimental import pallas as pl
from jax.experimental.pallas import tpu as pltpu


def _conv1x1_kernel(x_ref, w_ref, b_ref, o_ref):
    # x_ref: (C_in, tile_hw)      -- native NCHW slice (channels x pixels)
    # w_ref: (C_out_pad, C_in)    -- resident weight
    # b_ref: (C_out_pad, 1)       -- resident bias
    # o_ref: (C_out_pad, tile_hw) -- lane-dense output block
    acc = jnp.dot(w_ref[...], x_ref[...], preferred_element_type=jnp.float32)
    o_ref[...] = (acc + b_ref[...]).astype(o_ref.dtype)


def _round_up(v, m):
    return ((v + m - 1) // m) * m


@functools.partial(jax.jit, static_argnames=("num_anchors", "tile_hw"))
def landmark_head_forward(x_nchw, weight, bias, *, num_anchors=3, tile_hw=2048):
    """x_nchw: (N, C_in, H, W); weight: (C_out, C_in); bias: (C_out,)."""
    n, c_in, h, w = x_nchw.shape
    c_out = weight.shape[0]

    hw = h * w
    # Kernel reads the native NCHW layout as (N, C_in, H*W): no wrapper-side
    # transpose of the (large, C_in-channel) input tensor.
    x_rows = x_nchw.reshape(n, c_in, hw)

    # Pad C_out (30) up to a sublane multiple (32); padded rows are zeros and
    # get sliced off after the kernel.
    c_out_pad = _round_up(c_out, 8)
    w_pad = jnp.zeros((c_out_pad, c_in), dtype=weight.dtype).at[:c_out].set(weight)
    b_pad = jnp.zeros((c_out_pad, 1), dtype=bias.dtype).at[:c_out, 0].set(bias)

    # Clamp the pixel tile so tiny feature maps still honor the 128-lane
    # constraint; keep it a multiple of 128 for unmasked lane-dense stores.
    tile = min(int(tile_hw), _round_up(hw, 128))
    tile = _round_up(tile, 128)
    num_tiles = pl.cdiv(hw, tile)

    itemsize = jnp.dtype(x_nchw.dtype).itemsize
    flops = 2 * n * hw * c_in * c_out_pad
    bytes_accessed = itemsize * (
        n * c_in * hw + n * c_out_pad * hw + c_out_pad * c_in + c_out_pad
    )

    out_pad = pl.pallas_call(
        _conv1x1_kernel,
        out_shape=jax.ShapeDtypeStruct((n, c_out_pad, hw), x_nchw.dtype),
        grid=(n, num_tiles),
        in_specs=[
            pl.BlockSpec((None, c_in, tile), lambda b, t: (b, 0, t)),
            pl.BlockSpec((c_out_pad, c_in), lambda b, t: (0, 0)),
            pl.BlockSpec((c_out_pad, 1), lambda b, t: (0, 0)),
        ],
        out_specs=pl.BlockSpec((None, c_out_pad, tile), lambda b, t: (b, 0, t)),
        compiler_params=pltpu.CompilerParams(
            dimension_semantics=("parallel", "parallel"),
            vmem_limit_bytes=32 * 1024 * 1024,
        ),
        cost_estimate=pl.CostEstimate(
            flops=flops, transcendentals=0, bytes_accessed=bytes_accessed),
    )(x_rows, w_pad, b_pad)

    # Glue: drop channel padding, then permute the (small, 30-channel) result
    # to NHWC and reshape -- matches out.permute(0, 2, 3, 1).view(N, -1, 10).
    out = out_pad[:, :c_out, :]              # (N, C_out, H*W)
    out = jnp.transpose(out, (0, 2, 1))      # (N, H*W, C_out)
    return out.reshape(n, hw * num_anchors, 10)


def _reference(x, weight, bias, num_anchors):
    n, _, h, w = x.shape
    ref = jnp.einsum("nchw,oc->nhwo", x, weight) + bias
    return ref.reshape(n, h * w * num_anchors, 10)


if __name__ == "__main__":
    # Small shapes consistent with the module: in_channels=32, num_anchors=3.
    NUM_ANCHORS = 3
    C_OUT = NUM_ANCHORS * 10

    key = jax.random.PRNGKey(0)
    kx, kw, kb, kx2 = jax.random.split(key, 4)

    # Case 1: nicely aligned feature map.
    N, C_IN, H, W = 2, 32, 16, 16
    x = jax.random.normal(kx, (N, C_IN, H, W), dtype=jnp.float32)
    # Conv2d weight is (C_out, C_in, 1, 1); we keep the squeezed (C_out, C_in).
    weight = jax.random.normal(kw, (C_OUT, C_IN), dtype=jnp.float32) * 0.05
    bias = jax.random.normal(kb, (C_OUT,), dtype=jnp.float32) * 0.01

    out = landmark_head_forward(x, weight, bias, num_anchors=NUM_ANCHORS)
    out = jax.block_until_ready(out)
    ref = _reference(x, weight, bias, NUM_ANCHORS)
    assert out.shape == (N, H * W * NUM_ANCHORS, 10), out.shape
    assert jnp.allclose(out, ref, atol=1e-4, rtol=1e-4)

    # Case 2: odd feature-map size (H*W not a multiple of the tile) exercises
    # the cdiv / partial-block tail path.
    H2, W2 = 10, 10
    x2 = jax.random.normal(kx2, (N, C_IN, H2, W2), dtype=jnp.float32)
    out2 = landmark_head_forward(x2, weight, bias, num_anchors=NUM_ANCHORS)
    out2 = jax.block_until_ready(out2)
    ref2 = _reference(x2, weight, bias, NUM_ANCHORS)
    assert out2.shape == (N, H2 * W2 * NUM_ANCHORS, 10), out2.shape
    assert jnp.allclose(out2, ref2, atol=1e-4, rtol=1e-4)

    print("KERNEL_OK")
</pallas_src>

<mosaic_0001>
module attributes {stable_mosaic.version = 11 : i64} {
  func.func @_conv1x1_kernel(%arg0: i32, %arg1: i32, %arg2: memref<1x32x256xf32, #tpu.memory_space<vmem>>, %arg3: memref<32x32xf32, #tpu.memory_space<vmem>>, %arg4: memref<32x1xf32, #tpu.memory_space<vmem>>, %arg5: memref<1x32x256xf32, #tpu.memory_space<vmem>>) attributes {dimension_semantics = [#tpu.dimension_semantics<parallel>, #tpu.dimension_semantics<parallel>], iteration_bounds = array<i64: 2, 1>, scalar_prefetch = 0 : i64, scratch_operands = 0 : i64, tpu.core_type = #tpu.core_type<tc>, window_params = [{transform_indices = @transform_0, window_bounds = array<i64: 1, 32, 256>}, {pipeline_mode = #tpu.pipeline_mode<synchronous>, transform_indices = @transform_1, window_bounds = array<i64: 32, 32>}, {pipeline_mode = #tpu.pipeline_mode<synchronous>, transform_indices = @transform_2, window_bounds = array<i64: 32, 1>}, {transform_indices = @transform_3, window_bounds = array<i64: 1, 32, 256>}]} {
    %c0 = arith.constant 0 : index
    %c0_0 = arith.constant 0 : index
    %0 = vector.load %arg3[%c0, %c0_0] : memref<32x32xf32, #tpu.memory_space<vmem>>, vector<32x32xf32>
    %c0_1 = arith.constant 0 : index
    %c0_2 = arith.constant 0 : index
    %c0_3 = arith.constant 0 : index
    %1 = vector.load %arg2[%c0_1, %c0_2, %c0_3] : memref<1x32x256xf32, #tpu.memory_space<vmem>>, vector<1x32x256xf32>
    %2 = vector.shape_cast %1 : vector<1x32x256xf32> to vector<32x256xf32>
    %cst = arith.constant dense<0.000000e+00> : vector<32x256xf32>
    %3 = tpu.matmul %0, %2, %cst {dimension_numbers = #tpu.dot_dimension_numbers<[1], [0], [0], [1], [0, 0, 1, 1], [], []>} : vector<32x32xf32>, vector<32x256xf32>, vector<32x256xf32> -> vector<32x256xf32>
    %c0_4 = arith.constant 0 : index
    %c0_5 = arith.constant 0 : index
    %4 = vector.load %arg4[%c0_4, %c0_5] : memref<32x1xf32, #tpu.memory_space<vmem>>, vector<32x1xf32>
    %5 = vector.broadcast %4 : vector<32x1xf32> to vector<32x256xf32>
    %6 = arith.addf %3, %5 : vector<32x256xf32>
    %c0_6 = arith.constant 0 : index
    %c0_7 = arith.constant 0 : index
    %c0_8 = arith.constant 0 : index
    %7 = vector.load %arg5[%c0_6, %c0_7, %c0_8] : memref<1x32x256xf32, #tpu.memory_space<vmem>>, vector<1x32x256xf32>
    %8 = vector.shape_cast %7 : vector<1x32x256xf32> to vector<32x256xf32>
    %9 = vector.shape_cast %6 : vector<32x256xf32> to vector<1x32x256xf32>
    tpu.vector_store %arg5[%c0_6, %c0_7, %c0_8], %9 {strides = array<i32>} : memref<1x32x256xf32, #tpu.memory_space<vmem>>, vector<1x32x256xf32>,
    return
  }
  func.func @transform_0(%arg0: i32, %arg1: i32) -> (i32, i32, i32) {
    %c0_i32 = arith.constant 0 : i32
    %c0_i32_0 = arith.constant 0 : i32
    return %arg0, %c0_i32, %arg1 : i32, i32, i32
  }
  func.func @transform_1(%arg0: i32, %arg1: i32) -> (i32, i32) {
    %c0_i32 = arith.constant 0 : i32
    %c0_i32_0 = arith.constant 0 : i32
    %c0_i32_1 = arith.constant 0 : i32
    return %c0_i32, %c0_i32_0 : i32, i32
  }
  func.func @transform_2(%arg0: i32, %arg1: i32) -> (i32, i32) {
    %c0_i32 = arith.constant 0 : i32
    %c0_i32_0 = arith.constant 0 : i32
    %c0_i32_1 = arith.constant 0 : i32
    return %c0_i32, %c0_i32_0 : i32, i32
  }
  func.func @transform_3(%arg0: i32, %arg1: i32) -> (i32, i32, i32) {
    %c0_i32 = arith.constant 0 : i32
    %c0_i32_0 = arith.constant 0 : i32
    return %arg0, %c0_i32, %arg1 : i32, i32, i32
  }
}

</mosaic_0001>

<llo_original>
// kernel: landmark_head_forward.1
$region0: #{landmark_head_forward.1}
  #allocation0 [shape = 'u32[]', space=smem, size = 0x4, offset = 0x4, fixed_abs, tag = 'smem constant byte address 0x4 - core index']
  #allocation1 [shape = 'u32[144,128]{1,0:T(1,128)}', space=vmem, size = 0x12000, scoped, tag = 'internal scratch']
  %s0 = inlined_call_operand.vmem [shape: f32[2,32,256], index: 0, kind: input, shape index: {}]
  %s1 = inlined_call_operand.vmem [shape: f32[32,32], index: 1, kind: input, shape index: {}]
  %s2 = inlined_call_operand.vmem [shape: f32[32,1], index: 2, kind: input, shape index: {}]
  %s3 = inlined_call_operand.vmem [shape: f32[2,32,256], index: 3, kind: output, shape index: {}]
  %s4 = sld [smem:[#allocation0]]
  $region45: #{landmark_head_forward.1} parent=0
    _
  %s6 = ssub.s32 1, %s4
  %s7 = scalar_select 0, %s6, %s4
  loop: start=0, step=1, limit=4
  $region2: #{landmark_head_forward.1} parent=0 // loop_pre_header
    _
  $region3: #{landmark_head_forward.1} parent=0 // loop_header
    %s9 = sphi 0, %s13
    %p10 = scmp.ge.s32.totalorder %s9, 4
    %s16 = sphi 0, %s28
    %s17 = sphi 0, %s24
    %s18 = sphi 0, %s16
    %s19 = sphi 0, %s17
    %s20 = sphi 0, %s18
    %s21 = sphi 0, %s19
    %s33 = sphi 0, %s35
    %s36 = sphi 0, %s33
    %s37 = sphi 0, %s36
    %s53 = sphi 0, %s37
    %s57 = sphi 0, %s57
    %s59 = sphi 0, %s57
    %s60 = sphi 0, %s59
    %s74 = sphi 0, %s60
    %s78 = sphi 0, %s78
    %s80 = sphi 0, %s78
    %s81 = sphi 0, %s80
    %s95 = sphi 0, %s81
    %s103 = sphi 0, %s105
    %s106 = sphi 0, %s103
    %s107 = sphi 0, %s106
    %s123 = sphi 0, %s107
  $region4: #{landmark_head_forward.1} parent=0 // loop_header_branch
    %12 = sbr.rel (%p10) target = $region8
  $region5: #{landmark_head_forward.1} parent=0 // loop_body
    %s14 = ssub.s32 %s9, 1
    %s15 = ssub.s32 %s9, 2
    %s22 = sadd.s32 1, %s17
    %p23 = scmp.ge.s32.totalorder %s22, 1
    %s24 = scalar_select %p23, 0, %s22
    %s25 = sadd.s32 1, %s16
    %s26 = scalar_select %p23, %s25, %s16
    %p27 = scmp.ge.s32.totalorder %s26, 2
    %s28 = scalar_select %p27, 0, %s26
    %s29 = ssub.s32 %s16, %s28
    %s30 = ssub.s32 %s17, %s24
    %s31 = sor.u32 %s29, %s30
    %p32 = scmp.eq.s32.totalorder %s31, 0
    %s34 = sadd.s32 %s33, 1
    %s35 = scalar_select %p32, %s33, %s34
    %p38 = pneg %p32
    %p39 = scmp.eq.s32.totalorder %s9, 1
    %p40 = por %p38, %p39
    %p41 = scmp.ne.s32.totalorder %s33, %s36
    %p42 = scmp.eq.s32.totalorder %s9, 0
    %p43 = por %p41, %p42
    %p44 = scmp.ne.s32.totalorder %s33, %s36
    %p45 = scmp.eq.s32.totalorder %s14, 1
    %p46 = por %p44, %p45
    %p47 = scmp.ne.s32.totalorder %s36, %s37
    %p48 = scmp.eq.s32.totalorder %s14, 0
    %p49 = por %p47, %p48
    %p50 = scmp.ne.s32.totalorder %s36, %s37
    %p51 = scmp.eq.s32.totalorder %s15, 1
    %p52 = por %p50, %p51
    %p54 = scmp.ne.s32.totalorder %s37, %s53
    %p55 = scmp.eq.s32.totalorder %s15, 0
    %p56 = por %p54, %p55
    %s58 = sadd.s32 %s57, 1
    %p61 = scmp.eq.s32.totalorder %s9, 1
    %p62 = scmp.ne.s32.totalorder %s57, %s59
    %p63 = scmp.eq.s32.totalorder %s9, 0
    %p64 = por %p62, %p63
    %p65 = scmp.ne.s32.totalorder %s57, %s59
    %p66 = scmp.eq.s32.totalorder %s14, 1
    %p67 = por %p65, %p66
    %p68 = scmp.ne.s32.totalorder %s59, %s60
    %p69 = scmp.eq.s32.totalorder %s14, 0
    %p70 = por %p68, %p69
    %p71 = scmp.ne.s32.totalorder %s59, %s60
    %p72 = scmp.eq.s32.totalorder %s15, 1
    %p73 = por %p71, %p72
    %p75 = scmp.ne.s32.totalorder %s60, %s74
    %p76 = scmp.eq.s32.totalorder %s15, 0
    %p77 = por %p75, %p76
    %s79 = sadd.s32 %s78, 1
    %p82 = scmp.eq.s32.totalorder %s9, 1
    %p83 = scmp.ne.s32.totalorder %s78, %s80
    %p84 = scmp.eq.s32.totalorder %s9, 0
    %p85 = por %p83, %p84
    %p86 = scmp.ne.s32.totalorder %s78, %s80
    %p87 = scmp.eq.s32.totalorder %s14, 1
    %p88 = por %p86, %p87
    %p89 = scmp.ne.s32.totalorder %s80, %s81
    %p90 = scmp.eq.s32.totalorder %s14, 0
    %p91 = por %p89, %p90
    %p92 = scmp.ne.s32.totalorder %s80, %s81
    %p93 = scmp.eq.s32.totalorder %s15, 1
    %p94 = por %p92, %p93
    %p96 = scmp.ne.s32.totalorder %s81, %s95
    %p97 = scmp.eq.s32.totalorder %s15, 0
    %p98 = por %p96, %p97
    %s99 = ssub.s32 %s16, %s28
    %s100 = ssub.s32 %s17, %s24
    %s101 = sor.u32 %s99, %s100
    %p102 = scmp.eq.s32.totalorder %s101, 0
    %s104 = sadd.s32 %s103, 1
    %s105 = scalar_select %p102, %s103, %s104
    %p108 = pneg %p102
    %p109 = scmp.eq.s32.totalorder %s9, 1
    %p110 = por %p108, %p109
    %p111 = scmp.ne.s32.totalorder %s103, %s106
    %p112 = scmp.eq.s32.totalorder %s9, 0
    %p113 = por %p111, %p112
    %p114 = scmp.ne.s32.totalorder %s103, %s106
    %p115 = scmp.eq.s32.totalorder %s14, 1
    %p116 = por %p114, %p115
    %p117 = scmp.ne.s32.totalorder %s106, %s107
    %p118 = scmp.eq.s32.totalorder %s14, 0
    %p119 = por %p117, %p118
    %p120 = scmp.ne.s32.totalorder %s106, %s107
    %p121 = scmp.eq.s32.totalorder %s15, 1
    %p122 = por %p120, %p121
    %p124 = scmp.ne.s32.totalorder %s107, %s123
    %p125 = scmp.eq.s32.totalorder %s15, 0
    %p126 = por %p124, %p125
    %p127 = scmp.le.s32.totalorder 1, %s9
    %p128 = scmp.lt.s32.totalorder %s9, 3
    %p129 = pnand %p127, %p128
    %p130 = pneg %p129
    // Predicated region
    $region9: #{landmark_head_forward.1} parent=5 // pred_check
      _
    $region10: #{landmark_head_forward.1} parent=5 // pred_check_branch
      %132 = sbr.rel (%p129) target = $region12
    $region11: #{landmark_head_forward.1} parent=5 // pred_region
      %s133 = ssub.s32 %s9, 1
      // Predicated region
      $region13: #{landmark_head_forward.1} parent=11 // pred_check
        %p134 = pneg %p70
      $region14: #{landmark_head_forward.1} parent=11 // pred_check_branch
        %136 = sbr.rel (%p134) target = $region16
      $region15: #{landmark_head_forward.1} parent=11 // pred_region
        _
      $region16: #{landmark_head_forward.1} parent=11 // pred_fallthru
        _
      // Predicated region
      $region17: #{landmark_head_forward.1} parent=11 // pred_check
        %p137 = pneg %p91
      $region18: #{landmark_head_forward.1} parent=11 // pred_check_branch
        %139 = sbr.rel (%p137) target = $region20
      $region19: #{landmark_head_forward.1} parent=11 // pred_region
        _
      $region20: #{landmark_head_forward.1} parent=11 // pred_fallthru
        _
    $region12: #{landmark_head_forward.1} parent=5 // pred_fallthru
      _
    %p140 = scmp.lt.s32.totalorder %s9, 2
    // Predicated region
    $region21: #{landmark_head_forward.1} parent=5 // pred_check
      %p141 = pneg %p140
    $region22: #{landmark_head_forward.1} parent=5 // pred_check_branch
      %143 = sbr.rel (%p141) target = $region24
    $region23: #{landmark_head_forward.1} parent=5 // pred_region
      // Predicated region
      $region25: #{landmark_head_forward.1} parent=23 // pred_check
        %p144 = pneg %p43
      $region26: #{landmark_head_forward.1} parent=23 // pred_check_branch
        %146 = sbr.rel (%p144) target = $region28
      $region27: #{landmark_head_forward.1} parent=23 // pred_region
        %s147 = smul.u32 2, %s17
        %p148 = scmp.lt.s32.totalorder %s16, 1
        %s149 = scalar_select %p148, %s16, 1
        %p150 = scmp.lt.s32.totalorder %s147, 1
        %s151 = scalar_select %p150, %s147, 1
        %s152 = smul.addr %s149, 8
        %s153 = sadd.s32 %s151, %s152
        %s154 = smul.addr %s153, 8
        %s155 = scalar_lea.vmem %s0, %s154
        %s156 = smul.u32 2, %s17
      $region28: #{landmark_head_forward.1} parent=23 // pred_fallthru
        _
    $region24: #{landmark_head_forward.1} parent=5 // pred_fallthru
      _
    %p157 = scmp.le.s32.totalorder 1, %s9
    %p158 = scmp.lt.s32.totalorder %s9, 3
    %p159 = pnand %p157, %p158
    %p160 = pneg %p159
    // Predicated region
    $region29: #{landmark_head_forward.1} parent=5 // pred_check
      _
    $region30: #{landmark_head_forward.1} parent=5 // pred_check_branch
      %162 = sbr.rel (%p159) target = $region32
    $region31: #{landmark_head_forward.1} parent=5 // pred_region
      %s163 = ssub.s32 %s9, 1
      %s164 = smul.u32 2, %s19
      %p165 = scmp.lt.s32.totalorder %s18, 1
      %s166 = scalar_select %p165, %s18, 1
      %p167 = scmp.lt.s32.totalorder %s164, 1
      %s168 = scalar_select %p167, %s164, 1
      %s169 = smul.addr %s166, 8
      %s170 = sadd.s32 %s168, %s169
      %s171 = smul.addr %s170, 8
      %s172 = scalar_lea.vmem %s0, %s171
      %p173 = pneg %p49
      %p174 = pneg %p46
      %p175 = pneg %p70
      %p176 = pneg %p67
      %p177 = pneg %p91
      %p178 = pneg %p88
      %p179 = pneg %p119
      %p180 = pneg %p116
      %s181 = smul.u32 2, %s19
      %p182 = scmp.lt.s32.totalorder %s18, 1
      %s183 = scalar_select %p182, %s18, 1
      %p184 = scmp.lt.s32.totalorder %s181, 1
      %s185 = scalar_select %p184, %s181, 1
      %s186 = smul.addr %s183, 8
      %s187 = sadd.s32 %s185, %s186
      %s188 = smul.addr %s187, 8
      %s189 = scalar_lea.vmem %s3, %s188
      %s190 = smul.u32 2, %s19
      %p191 = scmp.lt.s32.totalorder %s18, 1
      %s192 = scalar_select %p191, %s18, 1
      %p193 = scmp.lt.s32.totalorder %s190, 1
      %s194 = scalar_select %p193, %s190, 1
      %s195 = smul.addr %s192, 8
      %s196 = sadd.s32 %s194, %s195
      %s197 = smul.addr %s196, 8
      %s198 = scalar_lea.vmem %s0, %s197
      %s199 = smul.u32 2, %s19
      %s200 = smul.u32 2, %s19
      %p201 = scmp.lt.s32.totalorder %s18, 1
      %s202 = scalar_select %p201, %s18, 1
      %p203 = scmp.lt.s32.totalorder %s200, 1
      %s204 = scalar_select %p203, %s200, 1
      %s205 = smul.addr %s202, 8
      %s206 = sadd.s32 %s204, %s205
      %s207 = smul.addr %s206, 8
      %s208 = scalar_lea.vmem %s3, %s207
      %s209 = smul.u32 2, %s19
      %v210 = vld [vmem:[%s1] sm:$0xff]
      %v211 = vld [vmem:[%s1 + $0x8] sm:$0xff]
      %v212 = vld [vmem:[%s1 + $0x10] sm:$0xff]
      %v213 = vld [vmem:[%s1 + $0x18] sm:$0xff]
      %v214 = vld [vmem:[%s198] sm:$0xff]
      %v215 = vld [vmem:[%s198 + $0x8] sm:$0xff]
      %v216 = vld [vmem:[%s198 + $0x10] sm:$0xff]
      %v217 = vld [vmem:[%s198 + $0x18] sm:$0xff]
      %v218 = vld [vmem:[%s198 + $0x20] sm:$0xff]
      %v219 = vld [vmem:[%s198 + $0x28] sm:$0xff]
      %v220 = vld [vmem:[%s198 + $0x30] sm:$0xff]
      %v221 = vld [vmem:[%s198 + $0x38] sm:$0xff]
      %v222 = vld [vmem:[%s2] sm:$0xff]
      %v223 = vld [vmem:[%s2 + $0x8] sm:$0xff]
      %v224 = vld [vmem:[%s2 + $0x10] sm:$0xff]
      %v225 = vld [vmem:[%s2 + $0x18] sm:$0xff]
      %227 = vset.pattern.permute.xlu0 0
      %228 = vperm.xlu0 %227, %v222
      %v229 = vpop.permute.xlu0 %228
      %232 = vset.pattern.permute.xlu0 0
      %233 = vperm.xlu0 %232, %v223
      %v234 = vpop.permute.xlu0 %233
      %237 = vset.pattern.permute.xlu0 0
      %238 = vperm.xlu0 %237, %v224
      %v239 = vpop.permute.xlu0 %238
      %242 = vset.pattern.permute.xlu0 0
      %243 = vperm.xlu0 %242, %v225
      %v244 = vpop.permute.xlu0 %243
      %vm246 = vcmask 261120
      %v248 = vsel %vm246, %v210, 0
      %v251 = vsel %vm246, %v211, 0
      %v254 = vsel %vm246, %v212, 0
      %v257 = vsel %vm246, %v213, 0
      %259 = vmatprep.subr.mxu0 %v215
      %260 = vmatpush1.msra.mxu0 %v214
      %261 = vmatprep.subr.mxu0 %v217
      %262 = vmatpush1.msra.mxu0 %v216
      %263 = vmatprep.subr.mxu0 %v219
      %264 = vmatpush1.msra.mxu0 %v218
      %265 = vmatprep.subr.mxu0 %v221
      %266 = vmatpush1.msra.mxu0 %v220
      %267 = vmatprep.subr.mxu0 0.0
      %268 = vmatpush1.msra.mxu0 0.0
      %269 = vmatprep.subr.mxu0 0.0
      %270 = vmatpush1.msra.mxu0 0.0
      %271 = vmatprep.subr.mxu0 0.0
      %272 = vmatpush1.msra.mxu0 0.0
      %273 = vmatprep.subr.mxu0 0.0
      %274 = vmatpush1.msra.mxu0 0.0
      %275 = vmatprep.subr.mxu0 0.0
      %276 = vmatpush1.msra.mxu0 0.0
      %277 = vmatprep.subr.mxu0 0.0
      %278 = vmatpush1.msra.mxu0 0.0
      %279 = vmatprep.subr.mxu0 0.0
      %280 = vmatpush1.msra.mxu0 0.0
      %281 = vmatprep.subr.mxu0 0.0
      %282 = vmatpush1.msra.mxu0 0.0
      %283 = vmatprep.subr.mxu0 0.0
      %284 = vmatpush1.msra.mxu0 0.0
      %285 = vmatprep.subr.mxu0 0.0
      %286 = vmatpush1.msra.mxu0 0.0
      %287 = vmatprep.subr.mxu0 0.0
      %288 = vmatpush1.msra.mxu0 0.0
      %289 = vmatprep.subr.mxu0 0.0
      %290 = vmatpush1.msra.mxu0 0.0
      %291 = vmatprep.subr.mxu0 0.0
      %292 = vmatpush1.msra.mxu0 0.0
      %293 = vmatprep.subr.mxu0 0.0
      %294 = vmatpush1.msra.mxu0 0.0
      %295 = vmatprep.subr.mxu0 0.0
      %296 = vmatpush1.msra.mxu0 0.0
      %297 = vmatprep.subr.mxu0 0.0
      %298 = vmatpush1.msra.mxu0 0.0
      %299 = vmatprep.subr.mxu0 0.0
      %300 = vmatpush1.msra.mxu0 0.0
      %301 = vmatprep.subr.mxu0 0.0
      %302 = vmatpush1.msra.mxu0 0.0
      %303 = vmatprep.subr.mxu0 0.0
      %304 = vmatpush1.msra.mxu0 0.0
      %305 = vmatprep.subr.mxu0 0.0
      %306 = vmatpush1.msra.mxu0 0.0
      %307 = vmatprep.subr.mxu0 0.0
      %308 = vmatpush1.msra.mxu0 0.0
      %309 = vmatprep.subr.mxu0 0.0
      %310 = vmatpush1.msra.mxu0 0.0
      %311 = vmatprep.subr.mxu0 0.0
      %312 = vmatpush1.msra.mxu0 0.0
      %313 = vmatprep.subr.mxu0 0.0
      %314 = vmatpush1.msra.mxu0 0.0
      %315 = vmatprep.subr.mxu0 0.0
      %316 = vmatpush1.msra.mxu0 0.0
      %317 = vmatprep.subr.mxu0 0.0
      %318 = vmatpush1.msra.mxu0 0.0
      %319 = vmatprep.subr.mxu0 0.0
      %320 = vmatpush1.msra.mxu0 0.0
      %321 = vmatprep.subr.mxu0 0.0
      %322 = vmatpush1.msra.mxu0 0.0
      %323 = vmatprep.mubr.f32.mxu0 0.0
      %324 = vmatmul.mubr.f32.gmra.mrb[0].mxu0 %v248
      %v325 = vpop.f32.mrb[0].mxu0
      %v326 = vadd.f32 %v229, %v325
      %v327 = vpop.f32.mrb[0].mxu0
      %v328 = vadd.f32 %v229, %v327
      %329 = vmatprep.mubr.f32.mxu0 0.0
      %330 = vmatmul.mubr.f32.gmra.mrb[0].mxu0 %v251
      %v331 = vpop.f32.mrb[0].mxu0
      %v332 = vadd.f32 %v234, %v331
      %v333 = vpop.f32.mrb[0].mxu0
      %v334 = vadd.f32 %v234, %v333
      %335 = vmatprep.mubr.f32.mxu0 0.0
      %336 = vmatmul.mubr.f32.gmra.mrb[0].mxu0 %v254
      %v337 = vpop.f32.mrb[0].mxu0
      %v338 = vadd.f32 %v239, %v337
      %v339 = vpop.f32.mrb[0].mxu0
      %v340 = vadd.f32 %v239, %v339
      %341 = vmatprep.mubr.f32.mxu0 0.0
      %342 = vmatmul.mubr.f32.gmra.mrb[0].mxu0 %v257
      %v343 = vpop.f32.mrb[0].mxu0
      %v344 = vadd.f32 %v244, %v343
      %v345 = vpop.f32.mrb[0].mxu0
      %v346 = vadd.f32 %v244, %v345
      %347 = vdwg.mxu0
      %348 = vst [vmem:[%s208] sm:$0xff] %v326
      %349 = vst [vmem:[%s208 + $0x8] sm:$0xff] %v328
      %350 = vst [vmem:[%s208 + $0x10] sm:$0xff] %v332
      %351 = vst [vmem:[%s208 + $0x18] sm:$0xff] %v334
      %352 = vst [vmem:[%s208 + $0x20] sm:$0xff] %v338
      %353 = vst [vmem:[%s208 + $0x28] sm:$0xff] %v340
      %354 = vst [vmem:[%s208 + $0x30] sm:$0xff] %v344
      %355 = vst [vmem:[%s208 + $0x38] sm:$0xff] %v346
      %s356 = smul.u32 2, %s19
      %p357 = scmp.lt.s32.totalorder %s18, 1
      %s358 = scalar_select %p357, %s18, 1
      %p359 = scmp.lt.s32.totalorder %s356, 1
      %s360 = scalar_select %p359, %s356, 1
      %s361 = smul.addr %s358, 8
      %s362 = sadd.s32 %s360, %s361
      %s363 = smul.addr %s362, 8
      %s364 = scalar_lea.vmem %s3, %s363
      // Predicated region
      $region33: #{landmark_head_forward.1} parent=31 // pred_check
        %p365 = pneg %p116
      $region34: #{landmark_head_forward.1} parent=31 // pred_check_branch
        %367 = sbr.rel (%p365) target = $region36
      $region35: #{landmark_head_forward.1} parent=31 // pred_region
        %s368 = smul.u32 2, %s19
      $region36: #{landmark_head_forward.1} parent=31 // pred_fallthru
        _
    $region32: #{landmark_head_forward.1} parent=5 // pred_fallthru
      _
    %p369 = scmp.le.s32.totalorder 2, %s9
    // Predicated region
    $region37: #{landmark_head_forward.1} parent=5 // pred_check
      %p370 = pneg %p369
    $region38: #{landmark_head_forward.1} parent=5 // pred_check_branch
      %372 = sbr.rel (%p370) target = $region40
    $region39: #{landmark_head_forward.1} parent=5 // pred_region
      %s373 = ssub.s32 %s9, 2
      // Predicated region
      $region41: #{landmark_head_forward.1} parent=39 // pred_check
        %p374 = pneg %p122
      $region42: #{landmark_head_forward.1} parent=39 // pred_check_branch
        %376 = sbr.rel (%p374) target = $region44
      $region43: #{landmark_head_forward.1} parent=39 // pred_region
        %s377 = smul.u32 2, %s21
        %p378 = scmp.lt.s32.totalorder %s20, 1
        %s379 = scalar_select %p378, %s20, 1
        %p380 = scmp.lt.s32.totalorder %s377, 1
        %s381 = scalar_select %p380, %s377, 1
        %s382 = smul.addr %s379, 8
        %s383 = sadd.s32 %s381, %s382
        %s384 = smul.addr %s383, 8
        %s385 = scalar_lea.vmem %s3, %s384
      $region44: #{landmark_head_forward.1} parent=39 // pred_fallthru
        _
    $region40: #{landmark_head_forward.1} parent=5 // pred_fallthru
      _
  $region6: #{landmark_head_forward.1} parent=0 // loop_footer
    %s13 = sadd.s32 1, %s9
  $region7: #{landmark_head_forward.1} parent=0 // loop_footer_branch
    %8 = sbr.rel target = $region3
  $region8: #{landmark_head_forward.1} parent=0 // loop_exit
    _

</llo_original>
